<compile_context>
chip_gen: v7x
topology: tpu7x:2x2x1
jax: 0.10.0
libtpu: 0.0.40
codegen_flags: <defaults>
</compile_context>

<pallas_src>
import functools

import jax
import jax.numpy as jnp
from jax.experimental import pallas as pl
from jax.experimental.pallas import tpu as pltpu

LANES = 128
TM_MAX = 2048       # rows per grid step (1 MiB f32 input tile); sweepable 1024-4096
STRIP_ROWS = 256    # rows per in-kernel strip: bounds elementwise temporaries


@functools.lru_cache(maxsize=None)
def _num_tensorcores() -> int:
    """2 on multi-TensorCore chips (v7x family), 1 on v5e/v6e.

    On single-TC chips a core axis would only shrink tiles, add grid steps and
    enlarge the uncovered tail for zero benefit, so it is disabled there.
    """
    # TODO(synk): on v7x verify with xprof that the leading "parallel" axis
    # really engages both TensorCores; if it does not, switch it to
    # pltpu.CORE_PARALLEL / pl.core_map once that path can be validated on HW.
    try:
        kind = jax.devices()[0].device_kind.lower()
    except Exception:
        return 1
    return 2 if "7" in kind else 1


def _sublane_granule(dtype) -> int:
    """Sublane multiple required for clean packing of sub-32-bit inputs."""
    return {4: 8, 2: 16, 1: 32}.get(jnp.dtype(dtype).itemsize, 8)


def _choose_tiling(rows_per_core: int, gran: int):
    """Static tile selection -> (tm, steps_per_core, strip); all Python ints."""
    if rows_per_core < gran:
        return 0, 0, 0
    strip = min(STRIP_ROWS, (rows_per_core // gran) * gran)
    tm_cap = min(TM_MAX, (rows_per_core // strip) * strip)
    # Candidate A: biggest tile (best coverage for large inputs).
    tm_a = tm_cap
    steps_a = rows_per_core // tm_a
    # Candidate B: one more, slightly smaller step (better coverage for
    # mid-size inputs just above TM_MAX rows -> smaller JAX tail).
    steps_b = -(-rows_per_core // TM_MAX)
    tm_b = max(strip, min(tm_cap, (rows_per_core // steps_b // strip) * strip))
    steps_b = rows_per_core // tm_b
    if steps_a * tm_a >= steps_b * tm_b:
        return tm_a, steps_a, strip
    return tm_b, steps_b, strip


# ------------------------------------------------------------------ kernel
def _partial_sums_kernel(x_ref, y_ref, sy_ref, sa_ref, sb_ref, *, strip, nstrips):
    step = pl.program_id(1)

    @pl.when(step == 0)
    def _():
        sy_ref[...] = jnp.zeros_like(sy_ref)
        sa_ref[...] = jnp.zeros_like(sa_ref)
        sb_ref[...] = jnp.zeros_like(sb_ref)

    def fold(v):
        # (strip, 128) -> (8, 128): pure vreg adds, keeps the XLU out of the
        # hot loop; the final tiny (8,128) reduce happens in plain JAX.
        return v.reshape(strip // 8, 8, LANES).sum(axis=0)

    def body(s, carry):
        sy, sa, sb = carry
        r0 = pl.multiple_of(s * strip, strip)
        x = x_ref[pl.ds(r0, strip), :].astype(jnp.float32)
        y = y_ref[pl.ds(r0, strip), :].astype(jnp.float32)
        # sp = softplus(-x) = log1p(exp(-|x|)) + max(-x, 0)   (overflow-safe)
        e = jnp.exp(-jnp.abs(x))                   # single exp per element (EUP)
        sp = jnp.log1p(e) + jnp.maximum(-x, 0.0)
        inv = pl.reciprocal(1.0 + e, approx=True)  # EUP vrcp; no true divide
        h = jnp.where(x >= 0.0, inv, e * inv)      # sigmoid(x), reuses e
        # cost*(h+1) == (1-y)*(x+sp)*(h+1) + hed_pos_weight * y*sp
        term_a = (1.0 - y) * (x + sp) * (h + 1.0)
        term_b = y * sp
        return sy + fold(y), sa + fold(term_a), sb + fold(term_b)

    # Strip loop keeps live VMEM temporaries O(strip x 128) instead of
    # materializing full (tm,128) e/sp/h/term buffers.  unroll is sweepable.
    sy, sa, sb = jax.lax.fori_loop(
        0, nstrips, body, (sy_ref[0], sa_ref[0], sb_ref[0]))
    sy_ref[0] = sy
    sa_ref[0] = sa
    sb_ref[0] = sb


def _partial_sums_ref(x, y):
    """Same three partial sums in plain JAX (small uncovered tail only)."""
    x = x.astype(jnp.float32)
    y = y.astype(jnp.float32)
    sp = jnp.log1p(jnp.exp(-jnp.abs(x))) + jnp.maximum(-x, 0.0)
    h = jax.nn.sigmoid(x)
    term_a = (1.0 - y) * (x + sp) * (h + 1.0)
    term_b = y * sp
    return jnp.sum(y), jnp.sum(term_a), jnp.sum(term_b)


# ----------------------------------------------------------------- wrapper
@jax.jit
def sigmoid_loss(prediction, target):
    """Mirrors sigmoid_loss.forward(prediction, target) -> scalar mean loss."""
    total = prediction.size
    ncores = _num_tensorcores()
    gran = max(_sublane_granule(prediction.dtype), _sublane_granule(target.dtype))

    x1 = prediction.reshape(-1)
    y1 = target.reshape(-1)

    rows_full = total // LANES
    tm, steps, strip = _choose_tiling(rows_full // ncores, gran)

    sy = sa = sb = jnp.float32(0.0)
    covered = 0
    if tm > 0:
        covered_rows = ncores * steps * tm
        covered = covered_rows * LANES
        main = rows_full * LANES
        if main == total:
            # Lane-dense 2-D view is a free reshape; uncovered trailing rows
            # are simply never touched by the kernel (no jnp.pad, no mask).
            x2 = x1.reshape(rows_full, LANES)
            y2 = y1.reshape(rows_full, LANES)
        else:
            # TODO(synk): totals not divisible by 128 still pay one slice copy
            # of the 128-aligned prefix (no lane-dense view exists without
            # moving data); still cheaper than the old full jnp.pad of both
            # inputs and the hot loop stays mask-free.
            x2 = x1[:main].reshape(rows_full, LANES)
            y2 = y1[:main].reshape(rows_full, LANES)

        kernel = functools.partial(
            _partial_sums_kernel, strip=strip, nstrips=tm // strip)
        part_shape = jax.ShapeDtypeStruct((ncores, 8, LANES), jnp.float32)
        part_spec = pl.BlockSpec((1, 8, LANES), lambda c, i: (c, 0, 0))
        in_spec = pl.BlockSpec((tm, LANES), lambda c, i: (c * steps + i, 0))

        psy, psa, psb = pl.pallas_call(
            kernel,
            out_shape=(part_shape, part_shape, part_shape),
            grid=(ncores, steps),
            in_specs=[in_spec, in_spec],
            out_specs=(part_spec, part_spec, part_spec),
            # TODO(synk): on v7x sweep pipeline_mode=pl.Buffered(3) on the two
            # input specs (fast HBM exposes DMA issue latency there).
            compiler_params=pltpu.CompilerParams(
                dimension_semantics=("parallel", "arbitrary"),
                vmem_limit_bytes=32 * 1024 * 1024),
        )(x2, y2)
        sy, sa, sb = jnp.sum(psy), jnp.sum(psa), jnp.sum(psb)

    if covered < total:
        # Uncovered tail (< ncores*tm*128 elements) reduced with plain jnp.
        t_sy, t_sa, t_sb = _partial_sums_ref(x1[covered:], y1[covered:])
        sy, sa, sb = sy + t_sy, sa + t_sa, sb + t_sb

    total_f = jnp.float32(total)
    count_pos = sy
    count_neg = total_f - count_pos
    beta = count_neg / total_f
    # TODO(synk): hed_pos_weight divides by zero when the target has no
    # positive pixels (behavior inherited from the torch module).
    hed_pos_weight = count_neg / count_pos
    return (1.0 - beta) * (sa + hed_pos_weight * sb) / total_f


# ------------------------------------------------ pure-JAX reference (torch 1:1)
def _reference(prediction, target):
    r, a = 1.0, 1.0
    x = prediction.astype(jnp.float32)
    y = target.astype(jnp.float32)
    count_neg = jnp.sum(1.0 - y)
    count_pos = jnp.sum(y)
    beta = count_neg / (count_neg + count_pos)
    hed_pos_weight = count_neg / count_pos
    h = jax.nn.sigmoid(x)
    pos_weight = hed_pos_weight * (1.0 / (a + h)) ** r
    l = 1.0 + (pos_weight - 1.0) * y
    cost = (1.0 - y) * x + l * (jnp.log1p(jnp.exp(-jnp.abs(x))) + jnp.maximum(-x, 0.0))
    return jnp.mean(cost * (h + a) ** r * (1.0 - beta))


def _check(pred, tgt, name):
    out = sigmoid_loss(pred, tgt)
    jax.block_until_ready(out)
    ref = _reference(pred, tgt)
    assert jnp.allclose(out, ref, rtol=5e-3, atol=1e-6), (name, out, ref)


if __name__ == "__main__":
    key = jax.random.PRNGKey(0)
    kx, ky = jax.random.split(key)

    # 1) Aligned NCHW input: batch=2, channels=4, spatial=16x16 -> 2048 elems.
    p1 = jax.random.normal(kx, (2, 4, 16, 16), dtype=jnp.float32)
    t1 = (jax.random.uniform(ky, (2, 4, 16, 16)) > 0.5).astype(jnp.float32)
    _check(p1, t1, "aligned_f32")

    # 2) Unaligned shape -> kernel on the 128-aligned prefix + small JAX tail.
    p2 = jax.random.normal(kx, (2, 3, 37, 41), dtype=jnp.float32)
    t2 = (jax.random.uniform(ky, (2, 3, 37, 41)) > 0.5).astype(jnp.float32)
    _check(p2, t2, "unaligned_f32")

    # 3) Tiny input (< one 128-lane row): pure-JAX fallback path.
    p3 = jax.random.normal(kx, (1, 3, 5, 7), dtype=jnp.float32)
    t3 = (jax.random.uniform(ky, (1, 3, 5, 7)) > 0.5).astype(jnp.float32)
    _check(p3, t3, "tiny_fallback")

    # 4) Narrow streaming dtypes (bf16 prediction, int8 target): fewer HBM
    #    bytes/element; tile rows snap to the 16/32 sublane granule.
    p4 = jax.random.normal(kx, (2, 8, 32, 32), dtype=jnp.float32).astype(jnp.bfloat16)
    t4 = (jax.random.uniform(ky, (2, 8, 32, 32)) > 0.5).astype(jnp.int8)
    _check(p4, t4, "bf16_int8")

    print("KERNEL_OK")
</pallas_src>

<mosaic_0001>
module attributes {stable_mosaic.version = 11 : i64} {
  func.func @_partial_sums_kernel(%arg0: i32, %arg1: i32, %arg2: memref<16x128xf32, #tpu.memory_space<vmem>>, %arg3: memref<16x128xf32, #tpu.memory_space<vmem>>, %arg4: memref<1x8x128xf32, #tpu.memory_space<vmem>>, %arg5: memref<1x8x128xf32, #tpu.memory_space<vmem>>, %arg6: memref<1x8x128xf32, #tpu.memory_space<vmem>>) attributes {dimension_semantics = [#tpu.dimension_semantics<parallel>, #tpu.dimension_semantics<arbitrary>], iteration_bounds = array<i64: 1, 1>, scalar_prefetch = 0 : i64, scratch_operands = 0 : i64, tpu.core_type = #tpu.core_type<tc>, window_params = [{transform_indices = @transform_0, window_bounds = array<i64: 16, 128>}, {transform_indices = @transform_1, window_bounds = array<i64: 16, 128>}, {transform_indices = @transform_2, window_bounds = array<i64: 1, 8, 128>}, {transform_indices = @transform_3, window_bounds = array<i64: 1, 8, 128>}, {transform_indices = @transform_4, window_bounds = array<i64: 1, 8, 128>}]} {
    %c0_i32 = arith.constant 0 : i32
    %0 = arith.cmpi eq, %arg1, %c0_i32 : i32
    %1 = arith.extui %0 : i1 to i32
    %c0_i32_0 = arith.constant 0 : i32
    %2 = arith.cmpi ne, %1, %c0_i32_0 : i32
    scf.if %2 {
      %cst_30 = arith.constant 0.000000e+00 : f32
      %58 = vector.broadcast %cst_30 : f32 to vector<1x8x128xf32>
      %c0_31 = arith.constant 0 : index
      %c0_32 = arith.constant 0 : index
      %c0_33 = arith.constant 0 : index
      %59 = vector.load %arg4[%c0_31, %c0_32, %c0_33] : memref<1x8x128xf32, #tpu.memory_space<vmem>>, vector<1x8x128xf32>
      tpu.vector_store %arg4[%c0_31, %c0_32, %c0_33], %58 {strides = array<i32>} : memref<1x8x128xf32, #tpu.memory_space<vmem>>, vector<1x8x128xf32>,
      %cst_34 = arith.constant 0.000000e+00 : f32
      %60 = vector.broadcast %cst_34 : f32 to vector<1x8x128xf32>
      %c0_35 = arith.constant 0 : index
      %c0_36 = arith.constant 0 : index
      %c0_37 = arith.constant 0 : index
      %61 = vector.load %arg5[%c0_35, %c0_36, %c0_37] : memref<1x8x128xf32, #tpu.memory_space<vmem>>, vector<1x8x128xf32>
      tpu.vector_store %arg5[%c0_35, %c0_36, %c0_37], %60 {strides = array<i32>} : memref<1x8x128xf32, #tpu.memory_space<vmem>>, vector<1x8x128xf32>,
      %cst_38 = arith.constant 0.000000e+00 : f32
      %62 = vector.broadcast %cst_38 : f32 to vector<1x8x128xf32>
      %c0_39 = arith.constant 0 : index
      %c0_40 = arith.constant 0 : index
      %c0_41 = arith.constant 0 : index
      %63 = vector.load %arg6[%c0_39, %c0_40, %c0_41] : memref<1x8x128xf32, #tpu.memory_space<vmem>>, vector<1x8x128xf32>
      tpu.vector_store %arg6[%c0_39, %c0_40, %c0_41], %62 {strides = array<i32>} : memref<1x8x128xf32, #tpu.memory_space<vmem>>, vector<1x8x128xf32>,
    } else {
    }
    %c0 = arith.constant 0 : index
    %c0_1 = arith.constant 0 : index
    %c0_2 = arith.constant 0 : index
    %3 = vector.load %arg4[%c0, %c0_1, %c0_2] : memref<1x8x128xf32, #tpu.memory_space<vmem>>, vector<1x8x128xf32>
    %4 = vector.shape_cast %3 : vector<1x8x128xf32> to vector<8x128xf32>
    %c0_3 = arith.constant 0 : index
    %c0_4 = arith.constant 0 : index
    %c0_5 = arith.constant 0 : index
    %5 = vector.load %arg5[%c0_3, %c0_4, %c0_5] : memref<1x8x128xf32, #tpu.memory_space<vmem>>, vector<1x8x128xf32>
    %6 = vector.shape_cast %5 : vector<1x8x128xf32> to vector<8x128xf32>
    %c0_6 = arith.constant 0 : index
    %c0_7 = arith.constant 0 : index
    %c0_8 = arith.constant 0 : index
    %7 = vector.load %arg6[%c0_6, %c0_7, %c0_8] : memref<1x8x128xf32, #tpu.memory_space<vmem>>, vector<1x8x128xf32>
    %8 = vector.shape_cast %7 : vector<1x8x128xf32> to vector<8x128xf32>
    %c0_i32_9 = arith.constant 0 : i32
    %c16_i32 = arith.constant 16 : i32
    %9 = arith.muli %c0_i32_9, %c16_i32 : i32
    %10 = tpu.assume_multiple %9, 16 : i32
    %11 = arith.index_cast %10 : i32 to index
    %c0_10 = arith.constant 0 : index
    %12 = vector.load %arg2[%11, %c0_10] : memref<16x128xf32, #tpu.memory_space<vmem>>, vector<16x128xf32>
    %13 = arith.index_cast %10 : i32 to index
    %c0_11 = arith.constant 0 : index
    %14 = vector.load %arg3[%13, %c0_11] : memref<16x128xf32, #tpu.memory_space<vmem>>, vector<16x128xf32>
    %15 = math.absf %12 : vector<16x128xf32>
    %cst = arith.constant 0.000000e+00 : f32
    %16 = vector.broadcast %cst : f32 to vector<16x128xf32>
    %17 = arith.subf %16, %15 : vector<16x128xf32>
    %18 = math.exp %17 : vector<16x128xf32>
    %19 = math.log1p %18 : vector<16x128xf32>
    %cst_12 = arith.constant 0.000000e+00 : f32
    %20 = vector.broadcast %cst_12 : f32 to vector<16x128xf32>
    %21 = arith.subf %20, %12 : vector<16x128xf32>
    %cst_13 = arith.constant 0.000000e+00 : f32
    %22 = vector.broadcast %cst_13 : f32 to vector<16x128xf32>
    %23 = arith.maximumf %21, %22 : vector<16x128xf32>
    %24 = arith.addf %19, %23 : vector<16x128xf32>
    %cst_14 = arith.constant 1.000000e+00 : f32
    %25 = vector.broadcast %cst_14 : f32 to vector<16x128xf32>
    %26 = arith.addf %25, %18 : vector<16x128xf32>
    %27 = tpu.reciprocal %26 {approx = true} : vector<16x128xf32> -> vector<16x128xf32>
    %cst_15 = arith.constant 0.000000e+00 : f32
    %28 = vector.broadcast %cst_15 : f32 to vector<16x128xf32>
    %29 = arith.cmpf oge, %12, %28 : vector<16x128xf32>
    %30 = arith.mulf %18, %27 : vector<16x128xf32>
    %31 = arith.select %29, %27, %30 : vector<16x128xi1>, vector<16x128xf32>
    %cst_16 = arith.constant 1.000000e+00 : f32
    %32 = vector.broadcast %cst_16 : f32 to vector<16x128xf32>
    %33 = arith.subf %32, %14 : vector<16x128xf32>
    %34 = arith.addf %12, %24 : vector<16x128xf32>
    %35 = arith.mulf %33, %34 : vector<16x128xf32>
    %cst_17 = arith.constant 1.000000e+00 : f32
    %36 = vector.broadcast %cst_17 : f32 to vector<16x128xf32>
    %37 = arith.addf %31, %36 : vector<16x128xf32>
    %38 = arith.mulf %35, %37 : vector<16x128xf32>
    %39 = arith.mulf %14, %24 : vector<16x128xf32>
    %40 = vector.shape_cast %14 : vector<16x128xf32> to vector<2x8x128xf32>
    %cst_18 = arith.constant dense<0.000000e+00> : vector<8x128xf32>
    %41 = vector.multi_reduction <add>, %40, %cst_18 [0] : vector<2x8x128xf32> to vector<8x128xf32>
    %42 = arith.addf %4, %41 : vector<8x128xf32>
    %43 = vector.shape_cast %38 : vector<16x128xf32> to vector<2x8x128xf32>
    %cst_19 = arith.constant dense<0.000000e+00> : vector<8x128xf32>
    %44 = vector.multi_reduction <add>, %43, %cst_19 [0] : vector<2x8x128xf32> to vector<8x128xf32>
    %45 = arith.addf %6, %44 : vector<8x128xf32>
    %46 = vector.shape_cast %39 : vector<16x128xf32> to vector<2x8x128xf32>
    %cst_20 = arith.constant dense<0.000000e+00> : vector<8x128xf32>
    %47 = vector.multi_reduction <add>, %46, %cst_20 [0] : vector<2x8x128xf32> to vector<8x128xf32>
    %48 = arith.addf %8, %47 : vector<8x128xf32>
    %c1_i32 = arith.constant 1 : i32
    %c0_21 = arith.constant 0 : index
    %c0_22 = arith.constant 0 : index
    %c0_23 = arith.constant 0 : index
    %49 = vector.load %arg4[%c0_21, %c0_22, %c0_23] : memref<1x8x128xf32, #tpu.memory_space<vmem>>, vector<1x8x128xf32>
    %50 = vector.shape_cast %49 : vector<1x8x128xf32> to vector<8x128xf32>
    %51 = vector.shape_cast %42 : vector<8x128xf32> to vector<1x8x128xf32>
    tpu.vector_store %arg4[%c0_21, %c0_22, %c0_23], %51 {strides = array<i32>} : memref<1x8x128xf32, #tpu.memory_space<vmem>>, vector<1x8x128xf32>,
    %c0_24 = arith.constant 0 : index
    %c0_25 = arith.constant 0 : index
    %c0_26 = arith.constant 0 : index
    %52 = vector.load %arg5[%c0_24, %c0_25, %c0_26] : memref<1x8x128xf32, #tpu.memory_space<vmem>>, vector<1x8x128xf32>
    %53 = vector.shape_cast %52 : vector<1x8x128xf32> to vector<8x128xf32>
    %54 = vector.shape_cast %45 : vector<8x128xf32> to vector<1x8x128xf32>
    tpu.vector_store %arg5[%c0_24, %c0_25, %c0_26], %54 {strides = array<i32>} : memref<1x8x128xf32, #tpu.memory_space<vmem>>, vector<1x8x128xf32>,
    %c0_27 = arith.constant 0 : index
    %c0_28 = arith.constant 0 : index
    %c0_29 = arith.constant 0 : index
    %55 = vector.load %arg6[%c0_27, %c0_28, %c0_29] : memref<1x8x128xf32, #tpu.memory_space<vmem>>, vector<1x8x128xf32>
    %56 = vector.shape_cast %55 : vector<1x8x128xf32> to vector<8x128xf32>
    %57 = vector.shape_cast %48 : vector<8x128xf32> to vector<1x8x128xf32>
    tpu.vector_store %arg6[%c0_27, %c0_28, %c0_29], %57 {strides = array<i32>} : memref<1x8x128xf32, #tpu.memory_space<vmem>>, vector<1x8x128xf32>,
    return
  }
  func.func @transform_0(%arg0: i32, %arg1: i32) -> (i32, i32) {
    %c1_i32 = arith.constant 1 : i32
    %0 = arith.muli %arg0, %c1_i32 : i32
    %1 = arith.addi %0, %arg1 : i32
    %c0_i32 = arith.constant 0 : i32
    %c0_i32_0 = arith.constant 0 : i32
    return %1, %c0_i32 : i32, i32
  }
  func.func @transform_1(%arg0: i32, %arg1: i32) -> (i32, i32) {
    %c1_i32 = arith.constant 1 : i32
    %0 = arith.muli %arg0, %c1_i32 : i32
    %1 = arith.addi %0, %arg1 : i32
    %c0_i32 = arith.constant 0 : i32
    %c0_i32_0 = arith.constant 0 : i32
    return %1, %c0_i32 : i32, i32
  }
  func.func @transform_2(%arg0: i32, %arg1: i32) -> (i32, i32, i32) {
    %c0_i32 = arith.constant 0 : i32
    %c0_i32_0 = arith.constant 0 : i32
    %c0_i32_1 = arith.constant 0 : i32
    return %arg0, %c0_i32, %c0_i32_0 : i32, i32, i32
  }
  func.func @transform_3(%arg0: i32, %arg1: i32) -> (i32, i32, i32) {
    %c0_i32 = arith.constant 0 : i32
    %c0_i32_0 = arith.constant 0 : i32
    %c0_i32_1 = arith.constant 0 : i32
    return %arg0, %c0_i32, %c0_i32_0 : i32, i32, i32
  }
  func.func @transform_4(%arg0: i32, %arg1: i32) -> (i32, i32, i32) {
    %c0_i32 = arith.constant 0 : i32
    %c0_i32_0 = arith.constant 0 : i32
    %c0_i32_1 = arith.constant 0 : i32
    return %arg0, %c0_i32, %c0_i32_0 : i32, i32, i32
  }
}

</mosaic_0001>

<llo_original>
// kernel: sigmoid_loss.1
$region0: #{sigmoid_loss.1}
  #allocation0 [shape = 'u32[]', space=smem, size = 0x4, offset = 0x4, fixed_abs, tag = 'smem constant byte address 0x4 - core index']
  #allocation1 [shape = 'u32[144,128]{1,0:T(1,128)}', space=vmem, size = 0x12000, scoped, tag = 'internal scratch']
  %s0 = inlined_call_operand.vmem [shape: f32[16,128], index: 0, kind: input, shape index: {}]
  %s1 = inlined_call_operand.vmem [shape: f32[16,128], index: 1, kind: input, shape index: {}]
  %s2 = inlined_call_operand.vmem [shape: f32[1,8,128], index: 2, kind: output, shape index: {0}]
  %s3 = inlined_call_operand.vmem [shape: f32[1,8,128], index: 3, kind: output, shape index: {1}]
  %s4 = inlined_call_operand.vmem [shape: f32[1,8,128], index: 4, kind: output, shape index: {2}]
  %5 = xla_tuple %s2, %s3, %s4
  %s6 = sld [smem:[#allocation0]]
  $region38: #{sigmoid_loss.1} parent=0
    _
  %s8 = ssub.s32 1, %s6
  %s9 = scalar_select 0, %s8, %s6
  // Predicated region
  $region2: #{sigmoid_loss.1} parent=0 // pred_check
    _
  $region3: #{sigmoid_loss.1} parent=0 // pred_check_branch
    %11 = sbr.rel (0) target = $region5
  $region4: #{sigmoid_loss.1} parent=0 // pred_region
    %s12 = sadd.s32 0, 0
    %s13 = smul.u32 2, %s12
    %p14 = scmp.lt.s32.totalorder %s13, 1
    %s15 = scalar_select %p14, %s13, 1
    %s16 = smul.addr %s15, 8
    %s17 = scalar_lea.vmem %s0, %s16
    %s18 = sadd.s32 0, 0
    %s19 = smul.u32 2, %s18
  $region5: #{sigmoid_loss.1} parent=0 // pred_fallthru
    _
  // Predicated region
  $region6: #{sigmoid_loss.1} parent=0 // pred_check
    _
  $region7: #{sigmoid_loss.1} parent=0 // pred_check_branch
    %21 = sbr.rel (0) target = $region9
  $region8: #{sigmoid_loss.1} parent=0 // pred_region
    %s22 = sadd.s32 0, 0
    %s23 = smul.u32 2, %s22
    %p24 = scmp.lt.s32.totalorder %s23, 1
    %s25 = scalar_select %p24, %s23, 1
    %s26 = smul.addr %s25, 8
    %s27 = scalar_lea.vmem %s1, %s26
    %s28 = sadd.s32 0, 0
    %s29 = smul.u32 2, %s28
  $region9: #{sigmoid_loss.1} parent=0 // pred_fallthru
    _
  %s30 = sadd.s32 0, 0
  %s31 = smul.u32 2, %s30
  %p32 = scmp.lt.s32.totalorder %s31, 1
  %s33 = scalar_select %p32, %s31, 1
  %s34 = smul.addr %s33, 8
  %s35 = scalar_lea.vmem %s0, %s34
  %s36 = sadd.s32 0, 0
  %s37 = smul.u32 2, %s36
  %p38 = scmp.lt.s32.totalorder %s37, 1
  %s39 = scalar_select %p38, %s37, 1
  %s40 = smul.addr %s39, 8
  %s41 = scalar_lea.vmem %s1, %s40
  %s42 = sadd.s32 0, 0
  %s43 = smul.u32 2, %s42
  %p44 = scmp.lt.s32.totalorder %s43, 1
  %s45 = scalar_select %p44, %s43, 1
  %s46 = smul.addr %s45, 8
  %s47 = scalar_lea.vmem %s0, %s46
  %s48 = sadd.s32 0, 0
  %s49 = smul.u32 2, %s48
  %s50 = sadd.s32 0, 0
  %s51 = smul.u32 2, %s50
  %p52 = scmp.lt.s32.totalorder %s51, 1
  %s53 = scalar_select %p52, %s51, 1
  %s54 = smul.addr %s53, 8
  %s55 = scalar_lea.vmem %s1, %s54
  %s56 = sadd.s32 0, 0
  %s57 = smul.u32 2, %s56
  %p58 = scmp.eq.s32.totalorder 0, 0
  // Predicated region
  $region10: #{sigmoid_loss.1} parent=0 // pred_check
    %p59 = pneg %p58
  $region11: #{sigmoid_loss.1} parent=0 // pred_check_branch
    %61 = sbr.rel (%p59) target = $region13
  $region12: #{sigmoid_loss.1} parent=0 // pred_region
    %62 = vst [vmem:[%s2] sm:$0xff] 0.0
    %63 = vst [vmem:[%s3] sm:$0xff] 0.0
    %64 = vst [vmem:[%s4] sm:$0xff] 0.0
  $region13: #{sigmoid_loss.1} parent=0 // pred_fallthru
    _
  %v65 = vld [vmem:[%s2] sm:$0xff]
  %v66 = vld [vmem:[%s3] sm:$0xff]
  %v67 = vld [vmem:[%s4] sm:$0xff]
  %v68 = vld [vmem:[%s47] sm:$0xff]
  %v69 = vld [vmem:[%s47 + $0x8] sm:$0xff]
  %v70 = vld [vmem:[%s55] sm:$0xff]
  %v71 = vld [vmem:[%s55 + $0x8] sm:$0xff]
  %v72 = vand.u32 2147483647, %v68
  %v73 = vand.u32 2147483647, %v69
  %v74 = vsub.f32 0.0, %v72
  %v75 = vsub.f32 0.0, %v73
  %v76 = vmul.f32 %v74, 1.442695
  %v77 = vpow.pop %v76
  %v78 = vmul.f32 %v75, 1.442695
  %v79 = vpow.pop %v78
  %v80 = vadd.f32 %v77, 1.0
  %v81 = vlog2.pop %v80
  %v82 = vmul.f32 %v81, 0.6931472
  %v83 = vmul.f32 -0.5, %v77
  %v84 = vadd.f32 %v83, 1.0
  %v85 = vmul.f32 %v84, %v77
  %v86 = vand.u32 2147483647, %v77
  %vm87 = vcmp.lt.f32.partialorder %v86, 0.0004427343
  %v88 = vsel %vm87, %v85, %v82
  %v89 = vadd.f32 %v79, 1.0
  %v90 = vlog2.pop %v89
  %v91 = vmul.f32 %v90, 0.6931472
  %v92 = vmul.f32 -0.5, %v79
  %v93 = vadd.f32 %v92, 1.0
  %v94 = vmul.f32 %v93, %v79
  %v95 = vand.u32 2147483647, %v79
  %vm96 = vcmp.lt.f32.partialorder %v95, 0.0004427343
  %v97 = vsel %vm96, %v94, %v91
  %v98 = vsub.f32 0.0, %v68
  %v99 = vsub.f32 0.0, %v69
  %v100 = vmax.f32 %v98, 0.0
  %v101 = vmax.f32 %v99, 0.0
  %v102 = vadd.f32 %v88, %v100
  %v103 = vadd.f32 %v97, %v101
  %v104 = vadd.f32 %v77, 1.0
  %v105 = vadd.f32 %v79, 1.0
  %v106 = vrcp.pop %v104
  %v107 = vrcp.pop %v105
  %vm108 = vcmp.ge.f32.partialorder %v68, 0.0
  %vm109 = vcmp.ge.f32.partialorder %v69, 0.0
  %v110 = vmul.f32 %v77, %v106
  %v111 = vmul.f32 %v79, %v107
  %v112 = vsel %vm108, %v106, %v110
  %v113 = vsel %vm109, %v107, %v111
  %v114 = vsub.f32 1.0, %v70
  %v115 = vsub.f32 1.0, %v71
  %v116 = vadd.f32 %v68, %v102
  %v117 = vadd.f32 %v69, %v103
  %v118 = vmul.f32 %v114, %v116
  %v119 = vmul.f32 %v115, %v117
  %v120 = vadd.f32 %v112, 1.0
  %v121 = vadd.f32 %v113, 1.0
  %v122 = vmul.f32 %v118, %v120
  %v123 = vmul.f32 %v119, %v121
  %v124 = vmul.f32 %v70, %v102
  %v125 = vmul.f32 %v71, %v103
  %v126 = vadd.f32 %v70, %v71
  %v127 = vadd.f32 %v65, %v126
  %v128 = vadd.f32 %v122, %v123
  %v129 = vadd.f32 %v66, %v128
  %v130 = vadd.f32 %v124, %v125
  %v131 = vadd.f32 %v67, %v130
  %132 = vst [vmem:[%s2] sm:$0xff] %v127
  %133 = vst [vmem:[%s3] sm:$0xff] %v129
  %134 = vst [vmem:[%s4] sm:$0xff] %v131
  // Predicated region
  $region14: #{sigmoid_loss.1} parent=0 // pred_check
    _
  $region15: #{sigmoid_loss.1} parent=0 // pred_check_branch
    %136 = sbr.rel (0) target = $region17
  $region16: #{sigmoid_loss.1} parent=0 // pred_region
    _
  $region17: #{sigmoid_loss.1} parent=0 // pred_fallthru
    _
  // Predicated region
  $region18: #{sigmoid_loss.1} parent=0 // pred_check
    _
  $region19: #{sigmoid_loss.1} parent=0 // pred_check_branch
    %138 = sbr.rel (0) target = $region21
  $region20: #{sigmoid_loss.1} parent=0 // pred_region
    _
  $region21: #{sigmoid_loss.1} parent=0 // pred_fallthru
    _
  // Predicated region
  $region22: #{sigmoid_loss.1} parent=0 // pred_check
    _
  $region23: #{sigmoid_loss.1} parent=0 // pred_check_branch
    %140 = sbr.rel (0) target = $region25
  $region24: #{sigmoid_loss.1} parent=0 // pred_region
    _
  $region25: #{sigmoid_loss.1} parent=0 // pred_fallthru
    _
  // Predicated region
  $region26: #{sigmoid_loss.1} parent=0 // pred_check
    _
  $region27: #{sigmoid_loss.1} parent=0 // pred_check_branch
    %142 = sbr.rel (0) target = $region29
  $region28: #{sigmoid_loss.1} parent=0 // pred_region
    _
  $region29: #{sigmoid_loss.1} parent=0 // pred_fallthru
    _
  // Predicated region
  $region30: #{sigmoid_loss.1} parent=0 // pred_check
    _
  $region31: #{sigmoid_loss.1} parent=0 // pred_check_branch
    %144 = sbr.rel (0) target = $region33
  $region32: #{sigmoid_loss.1} parent=0 // pred_region
    _
  $region33: #{sigmoid_loss.1} parent=0 // pred_fallthru
    _
  // Predicated region
  $region34: #{sigmoid_loss.1} parent=0 // pred_check
    _
  $region35: #{sigmoid_loss.1} parent=0 // pred_check_branch
    %146 = sbr.rel (0) target = $region37
  $region36: #{sigmoid_loss.1} parent=0 // pred_region
    _
  $region37: #{sigmoid_loss.1} parent=0 // pred_fallthru
    _

</llo_original>
